<compile_context>
chip_gen: v5e
topology: v5e:2x2
jax: 0.10.0
libtpu: 0.0.40
codegen_flags: <defaults>
</compile_context>

<pallas_src>
import functools

import jax
import jax.numpy as jnp
from jax.experimental import pallas as pl
from jax.experimental.pallas import tpu as pltpu

_NSEM = 8                      # DMA-semaphore pool for the HBM row-gather path
_NEG_PAD = -1e30               # lane-padding value for the class axis


def _round_up(x, m):
    return (x + m - 1) // m * m


def _make_kernel(n_tokens, vocab, row_tile, vocab_pad, with_loss,
                 table_resident):
    """Kernel refs, in order:
         ids_ref    : (n_pad,) int32 SMEM (scalar prefetch)
        [tgt_ref]   : (row_tile, 1) int32 VMEM block        (with_loss only)
         table_ref  : (vocab, vocab_pad) f32 VMEM (resident) or HBM (pl.ANY)
         logits_ref : (row_tile, vocab_pad) f32 VMEM output block
        [loss_ref]  : (1, 1, 1) f32 per-tile partial-sum output (with_loss)
        [sems]      : (_NSEM,) DMA semaphores                (HBM path only)
    """
    del vocab  # padding columns handled on the host (-1e30), not in-kernel

    def gather_rows(ids_ref, table_ref, logits_ref, sems):
        base = pl.program_id(0) * row_tile
        if table_resident:
            # Table lives in VMEM: dynamic sublane slice per row, written
            # straight into the output block (no scratch, no extra copy).
            for j in range(row_tile):
                row = ids_ref[base + j]
                logits_ref[pl.ds(j, 1), :] = table_ref[pl.ds(row, 1), :]
        else:
            # Table lives in HBM: per-row DMA directly into the output block,
            # waited on the same descriptors that were started.
            copies = []
            for j in range(row_tile):
                row = ids_ref[base + j]
                cp = pltpu.make_async_copy(table_ref.at[row],
                                           logits_ref.at[j],
                                           sems.at[j % _NSEM])
                cp.start()
                copies.append(cp)
            for cp in copies:
                cp.wait()

    def kernel(*refs):
        if with_loss:
            if table_resident:
                ids_ref, tgt_ref, table_ref, logits_ref, loss_ref = refs
                sems = None
            else:
                ids_ref, tgt_ref, table_ref, logits_ref, loss_ref, sems = refs
        else:
            if table_resident:
                ids_ref, table_ref, logits_ref = refs
                sems = None
            else:
                ids_ref, table_ref, logits_ref, sems = refs

        gather_rows(ids_ref, table_ref, logits_ref, sems)

        if not with_loss:
            return

        base = pl.program_id(0) * row_tile
        gathered = logits_ref[...]                        # (row_tile, vocab_pad)

        # Pad lanes already hold -1e30 (host padding): no mask/select needed.
        m = jnp.max(gathered, axis=-1, keepdims=True)               # (rt, 1)
        lse = m + jnp.log(jnp.sum(jnp.exp(gathered - m), axis=-1,
                                  keepdims=True))                   # (rt, 1)

        col = jax.lax.broadcasted_iota(jnp.int32, (row_tile, vocab_pad), 1)
        tgt = tgt_ref[...]                                           # (rt, 1)
        tgt_logit = jnp.sum(jnp.where(col == tgt, gathered, 0.0),
                            axis=-1, keepdims=True)                  # (rt, 1)

        # Mask rows beyond the true N (last tile may be partial).
        row_i = jax.lax.broadcasted_iota(jnp.int32, (row_tile, 1), 0)
        valid = (base + row_i) < n_tokens
        contrib = jnp.where(valid, lse - tgt_logit, 0.0)

        # Per-tile partial sum; reduction + 1/N happen outside the kernel.
        loss_ref[...] = jnp.sum(contrib, keepdims=True).reshape(1, 1, 1)

    return kernel


@functools.lru_cache(maxsize=None)
def _build_bigram_call(n_tokens, vocab, with_loss):
    vocab_pad = _round_up(vocab, 128)                # lane-dense class axis
    table_bytes = vocab * vocab_pad * 4
    table_resident = table_bytes <= 8 * (1 << 20)    # fits VMEM comfortably

    # Vocab-aware row tile: budget = 2x double-buffered logits blocks
    # (+ resident table), kept well under v7x's 64 MiB physical VMEM.
    budget = 40 * (1 << 20)
    avail = budget - (2 * table_bytes if table_resident else 0)
    row_tile = int(min(256, max(8, avail // (2 * vocab_pad * 4)))) // 8 * 8
    row_tile = max(8, row_tile)
    if n_tokens <= 64:
        row_tile = 8                                  # small-shape path
    row_tile = min(row_tile, _round_up(n_tokens, 8))

    n_pad = _round_up(n_tokens, row_tile)
    num_tiles = n_pad // row_tile

    kernel = _make_kernel(n_tokens, vocab, row_tile, vocab_pad, with_loss,
                          table_resident)

    in_specs = []
    if with_loss:
        in_specs.append(pl.BlockSpec((row_tile, 1), lambda i, ids: (i, 0)))
    if table_resident:
        # Constant block index -> table stays resident in VMEM across steps.
        in_specs.append(pl.BlockSpec((vocab, vocab_pad),
                                     lambda i, ids: (0, 0)))
    else:
        in_specs.append(pl.BlockSpec(memory_space=pl.ANY))   # raw HBM ref

    logits_spec = pl.BlockSpec((row_tile, vocab_pad), lambda i, ids: (i, 0))
    logits_shape = jax.ShapeDtypeStruct((n_pad, vocab_pad), jnp.float32)

    if with_loss:
        out_specs = (logits_spec,
                     pl.BlockSpec((1, 1, 1), lambda i, ids: (i, 0, 0)))
        out_shape = (logits_shape,
                     jax.ShapeDtypeStruct((num_tiles, 1, 1), jnp.float32))
    else:
        out_specs = logits_spec
        out_shape = logits_shape

    scratch_shapes = []
    if not table_resident:
        scratch_shapes.append(pltpu.SemaphoreType.DMA((_NSEM,)))

    vmem_needed = (2 * row_tile * vocab_pad * 4
                   + (2 * table_bytes if table_resident else 0)
                   + 2 * row_tile * 128 * 4          # lane-padded targets blk
                   + (1 << 20))
    vmem_limit = int(min(100 * (1 << 20),
                         max(32 * (1 << 20), 2 * vmem_needed)))

    grid_spec = pltpu.PrefetchScalarGridSpec(
        num_scalar_prefetch=1,                       # token ids -> SMEM
        grid=(num_tiles,),
        in_specs=in_specs,
        out_specs=out_specs,
        scratch_shapes=scratch_shapes,
    )

    call = pl.pallas_call(
        kernel,
        grid_spec=grid_spec,
        out_shape=out_shape,
        # Per-tile partial loss sums -> no cross-step accumulator, so the
        # grid axis is "parallel" (megacore sharding on v7x).
        compiler_params=pltpu.CompilerParams(
            dimension_semantics=("parallel",),
            vmem_limit_bytes=vmem_limit),
    )

    run = jax.jit(call)
    return run, row_tile, n_pad, vocab_pad, num_tiles


def bigram_forward(index, table, targets=None):
    """Mirrors BigramLanguageModel.forward.

    index:   (B, T) int token ids
    table:   (V, V) f32 embedding table
    targets: optional (B, T) int
    Returns (logits, loss): logits is (B, T, V) when targets is None,
    else (B*T, V), matching the PyTorch module.
    """
    B, T = index.shape
    V = table.shape[0]
    N = B * T
    with_loss = targets is not None

    run, _, n_pad, v_pad, _ = _build_bigram_call(N, V, with_loss)

    # Clip once on the host (PyTorch would raise on OOB ids; we clamp).
    ids = jnp.clip(index.reshape(N).astype(jnp.int32), 0, V - 1)
    ids_pad = jnp.pad(ids, (0, n_pad - N))
    # Pad the class axis with -1e30 so the kernel needs no column mask;
    # callers only ever see logits[:, :V].
    table_pad = jnp.pad(table.astype(jnp.float32), ((0, 0), (0, v_pad - V)),
                        constant_values=_NEG_PAD)

    if with_loss:
        tgt = jnp.clip(targets.reshape(N).astype(jnp.int32), 0, V - 1)
        tgt_pad = jnp.pad(tgt, (0, n_pad - N)).reshape(n_pad, 1)
        logits_pad, loss_parts = run(ids_pad, tgt_pad, table_pad)
        logits = logits_pad[:N, :V]
        loss = jnp.sum(loss_parts) / N
        return logits, loss

    logits_pad = run(ids_pad, table_pad)
    logits = logits_pad[:N, :V]
    return logits.reshape(B, T, V), None


if __name__ == "__main__":
    # Small, forward-consistent shapes: batch=2, seq=8, vocab=32.
    B, T, V = 2, 8, 32

    key = jax.random.PRNGKey(0)
    k_tab, k_idx, k_tgt = jax.random.split(key, 3)

    # nn.Embedding default init: N(0, 1).
    table = jax.random.normal(k_tab, (V, V), dtype=jnp.float32)
    index = jax.random.randint(k_idx, (B, T), 0, V, dtype=jnp.int32)
    targets = jax.random.randint(k_tgt, (B, T), 0, V, dtype=jnp.int32)

    logits, loss = bigram_forward(index, table, targets)
    logits = jax.block_until_ready(logits)
    loss = jax.block_until_ready(loss)

    # Reference: embedding gather + mean cross-entropy in plain JAX.
    ref_logits = table[index.reshape(B * T)]
    ref_lse = jax.scipy.special.logsumexp(ref_logits, axis=-1)
    ref_loss = jnp.mean(
        ref_lse - ref_logits[jnp.arange(B * T), targets.reshape(B * T)])

    assert logits.shape == (B * T, V)
    assert jnp.allclose(logits, ref_logits, atol=1e-5), "logits mismatch"
    assert jnp.allclose(loss, ref_loss, atol=1e-5), "loss mismatch"

    # targets=None branch: returns (B, T, V) logits and no loss.
    logits_3d, no_loss = bigram_forward(index, table, None)
    logits_3d = jax.block_until_ready(logits_3d)
    assert logits_3d.shape == (B, T, V) and no_loss is None
    assert jnp.allclose(logits_3d.reshape(B * T, V), ref_logits, atol=1e-5)

    print("KERNEL_OK")
</pallas_src>

<mosaic_0001>
module attributes {stable_mosaic.version = 11 : i64} {
  func.func @kernel(%arg0: i32, %arg1: memref<16xi32, #tpu.memory_space<smem>>, %arg2: memref<8x1xi32, #tpu.memory_space<vmem>>, %arg3: memref<32x128xf32, #tpu.memory_space<vmem>>, %arg4: memref<8x128xf32, #tpu.memory_space<vmem>>, %arg5: memref<1x1x1xf32, #tpu.memory_space<vmem>>) attributes {dimension_semantics = [#tpu.dimension_semantics<parallel>], iteration_bounds = array<i64: 2>, scalar_prefetch = 1 : i64, scratch_operands = 0 : i64, tpu.core_type = #tpu.core_type<tc>, window_params = [{transform_indices = @transform_0, window_bounds = array<i64: 8, 1>}, {pipeline_mode = #tpu.pipeline_mode<synchronous>, transform_indices = @transform_1, window_bounds = array<i64: 32, 128>}, {transform_indices = @transform_2, window_bounds = array<i64: 8, 128>}, {transform_indices = @transform_3, window_bounds = array<i64: 1, 1, 1>}]} {
    %c8_i32 = arith.constant 8 : i32
    %0 = arith.muli %arg0, %c8_i32 : i32
    %c0_i32 = arith.constant 0 : i32
    %1 = arith.addi %0, %c0_i32 : i32
    %2 = arith.index_cast %1 : i32 to index
    %3 = memref.load %arg1[%2] : memref<16xi32, #tpu.memory_space<smem>>
    %4 = arith.index_cast %3 : i32 to index
    %c0 = arith.constant 0 : index
    %5 = vector.load %arg3[%4, %c0] : memref<32x128xf32, #tpu.memory_space<vmem>>, vector<1x128xf32>
    %c0_0 = arith.constant 0 : index
    %c0_1 = arith.constant 0 : index
    %6 = vector.load %arg4[%c0_0, %c0_1] : memref<8x128xf32, #tpu.memory_space<vmem>>, vector<1x128xf32>
    tpu.vector_store %arg4[%c0_0, %c0_1], %5 {strides = array<i32>} : memref<8x128xf32, #tpu.memory_space<vmem>>, vector<1x128xf32>,
    %c1_i32 = arith.constant 1 : i32
    %7 = arith.addi %0, %c1_i32 : i32
    %8 = arith.index_cast %7 : i32 to index
    %9 = memref.load %arg1[%8] : memref<16xi32, #tpu.memory_space<smem>>
    %10 = arith.index_cast %9 : i32 to index
    %c0_2 = arith.constant 0 : index
    %11 = vector.load %arg3[%10, %c0_2] : memref<32x128xf32, #tpu.memory_space<vmem>>, vector<1x128xf32>
    %c1 = arith.constant 1 : index
    %c0_3 = arith.constant 0 : index
    %12 = vector.load %arg4[%c1, %c0_3] : memref<8x128xf32, #tpu.memory_space<vmem>>, vector<1x128xf32>
    tpu.vector_store %arg4[%c1, %c0_3], %11 {strides = array<i32>} : memref<8x128xf32, #tpu.memory_space<vmem>>, vector<1x128xf32>,
    %c2_i32 = arith.constant 2 : i32
    %13 = arith.addi %0, %c2_i32 : i32
    %14 = arith.index_cast %13 : i32 to index
    %15 = memref.load %arg1[%14] : memref<16xi32, #tpu.memory_space<smem>>
    %16 = arith.index_cast %15 : i32 to index
    %c0_4 = arith.constant 0 : index
    %17 = vector.load %arg3[%16, %c0_4] : memref<32x128xf32, #tpu.memory_space<vmem>>, vector<1x128xf32>
    %c2 = arith.constant 2 : index
    %c0_5 = arith.constant 0 : index
    %18 = vector.load %arg4[%c2, %c0_5] : memref<8x128xf32, #tpu.memory_space<vmem>>, vector<1x128xf32>
    tpu.vector_store %arg4[%c2, %c0_5], %17 {strides = array<i32>} : memref<8x128xf32, #tpu.memory_space<vmem>>, vector<1x128xf32>,
    %c3_i32 = arith.constant 3 : i32
    %19 = arith.addi %0, %c3_i32 : i32
    %20 = arith.index_cast %19 : i32 to index
    %21 = memref.load %arg1[%20] : memref<16xi32, #tpu.memory_space<smem>>
    %22 = arith.index_cast %21 : i32 to index
    %c0_6 = arith.constant 0 : index
    %23 = vector.load %arg3[%22, %c0_6] : memref<32x128xf32, #tpu.memory_space<vmem>>, vector<1x128xf32>
    %c3 = arith.constant 3 : index
    %c0_7 = arith.constant 0 : index
    %24 = vector.load %arg4[%c3, %c0_7] : memref<8x128xf32, #tpu.memory_space<vmem>>, vector<1x128xf32>
    tpu.vector_store %arg4[%c3, %c0_7], %23 {strides = array<i32>} : memref<8x128xf32, #tpu.memory_space<vmem>>, vector<1x128xf32>,
    %c4_i32 = arith.constant 4 : i32
    %25 = arith.addi %0, %c4_i32 : i32
    %26 = arith.index_cast %25 : i32 to index
    %27 = memref.load %arg1[%26] : memref<16xi32, #tpu.memory_space<smem>>
    %28 = arith.index_cast %27 : i32 to index
    %c0_8 = arith.constant 0 : index
    %29 = vector.load %arg3[%28, %c0_8] : memref<32x128xf32, #tpu.memory_space<vmem>>, vector<1x128xf32>
    %c4 = arith.constant 4 : index
    %c0_9 = arith.constant 0 : index
    %30 = vector.load %arg4[%c4, %c0_9] : memref<8x128xf32, #tpu.memory_space<vmem>>, vector<1x128xf32>
    tpu.vector_store %arg4[%c4, %c0_9], %29 {strides = array<i32>} : memref<8x128xf32, #tpu.memory_space<vmem>>, vector<1x128xf32>,
    %c5_i32 = arith.constant 5 : i32
    %31 = arith.addi %0, %c5_i32 : i32
    %32 = arith.index_cast %31 : i32 to index
    %33 = memref.load %arg1[%32] : memref<16xi32, #tpu.memory_space<smem>>
    %34 = arith.index_cast %33 : i32 to index
    %c0_10 = arith.constant 0 : index
    %35 = vector.load %arg3[%34, %c0_10] : memref<32x128xf32, #tpu.memory_space<vmem>>, vector<1x128xf32>
    %c5 = arith.constant 5 : index
    %c0_11 = arith.constant 0 : index
    %36 = vector.load %arg4[%c5, %c0_11] : memref<8x128xf32, #tpu.memory_space<vmem>>, vector<1x128xf32>
    tpu.vector_store %arg4[%c5, %c0_11], %35 {strides = array<i32>} : memref<8x128xf32, #tpu.memory_space<vmem>>, vector<1x128xf32>,
    %c6_i32 = arith.constant 6 : i32
    %37 = arith.addi %0, %c6_i32 : i32
    %38 = arith.index_cast %37 : i32 to index
    %39 = memref.load %arg1[%38] : memref<16xi32, #tpu.memory_space<smem>>
    %40 = arith.index_cast %39 : i32 to index
    %c0_12 = arith.constant 0 : index
    %41 = vector.load %arg3[%40, %c0_12] : memref<32x128xf32, #tpu.memory_space<vmem>>, vector<1x128xf32>
    %c6 = arith.constant 6 : index
    %c0_13 = arith.constant 0 : index
    %42 = vector.load %arg4[%c6, %c0_13] : memref<8x128xf32, #tpu.memory_space<vmem>>, vector<1x128xf32>
    tpu.vector_store %arg4[%c6, %c0_13], %41 {strides = array<i32>} : memref<8x128xf32, #tpu.memory_space<vmem>>, vector<1x128xf32>,
    %c7_i32 = arith.constant 7 : i32
    %43 = arith.addi %0, %c7_i32 : i32
    %44 = arith.index_cast %43 : i32 to index
    %45 = memref.load %arg1[%44] : memref<16xi32, #tpu.memory_space<smem>>
    %46 = arith.index_cast %45 : i32 to index
    %c0_14 = arith.constant 0 : index
    %47 = vector.load %arg3[%46, %c0_14] : memref<32x128xf32, #tpu.memory_space<vmem>>, vector<1x128xf32>
    %c7 = arith.constant 7 : index
    %c0_15 = arith.constant 0 : index
    %48 = vector.load %arg4[%c7, %c0_15] : memref<8x128xf32, #tpu.memory_space<vmem>>, vector<1x128xf32>
    tpu.vector_store %arg4[%c7, %c0_15], %47 {strides = array<i32>} : memref<8x128xf32, #tpu.memory_space<vmem>>, vector<1x128xf32>,
    %c8_i32_16 = arith.constant 8 : i32
    %49 = arith.muli %arg0, %c8_i32_16 : i32
    %c0_17 = arith.constant 0 : index
    %c0_18 = arith.constant 0 : index
    %50 = vector.load %arg4[%c0_17, %c0_18] : memref<8x128xf32, #tpu.memory_space<vmem>>, vector<8x128xf32>
    %cst = arith.constant dense<0xFF800000> : vector<8xf32>
    %51 = vector.multi_reduction <maximumf>, %50, %cst [1] : vector<8x128xf32> to vector<8xf32>
    %52 = vector.shape_cast %51 : vector<8xf32> to vector<8x1xf32>
    %53 = vector.broadcast %52 : vector<8x1xf32> to vector<8x128xf32>
    %54 = arith.subf %50, %53 : vector<8x128xf32>
    %55 = math.exp %54 : vector<8x128xf32>
    %cst_19 = arith.constant dense<0.000000e+00> : vector<8xf32>
    %56 = vector.multi_reduction <add>, %55, %cst_19 [1] : vector<8x128xf32> to vector<8xf32>
    %57 = vector.shape_cast %56 : vector<8xf32> to vector<8x1xf32>
    %58 = math.log %57 : vector<8x1xf32>
    %59 = arith.addf %52, %58 : vector<8x1xf32>
    %60 = tpu.iota {dimensions = array<i32: 1>} : vector<8x128xi32>
    %c0_20 = arith.constant 0 : index
    %c0_21 = arith.constant 0 : index
    %61 = vector.load %arg2[%c0_20, %c0_21] : memref<8x1xi32, #tpu.memory_space<vmem>>, vector<8x1xi32>
    %62 = vector.broadcast %61 : vector<8x1xi32> to vector<8x128xi32>
    %63 = arith.cmpi eq, %60, %62 : vector<8x128xi32>
    %cst_22 = arith.constant 0.000000e+00 : f32
    %64 = vector.broadcast %cst_22 : f32 to vector<8x128xf32>
    %65 = arith.select %63, %50, %64 : vector<8x128xi1>, vector<8x128xf32>
    %cst_23 = arith.constant dense<0.000000e+00> : vector<8xf32>
    %66 = vector.multi_reduction <add>, %65, %cst_23 [1] : vector<8x128xf32> to vector<8xf32>
    %67 = vector.shape_cast %66 : vector<8xf32> to vector<8x1xf32>
    %68 = tpu.iota {dimensions = array<i32: 0>} : vector<8x1xi32>
    %69 = vector.broadcast %49 : i32 to vector<8x1xi32>
    %70 = arith.addi %69, %68 : vector<8x1xi32>
    %c16_i32 = arith.constant 16 : i32
    %71 = vector.broadcast %c16_i32 : i32 to vector<8x1xi32>
    %72 = arith.cmpi slt, %70, %71 : vector<8x1xi32>
    %73 = arith.subf %59, %67 : vector<8x1xf32>
    %cst_24 = arith.constant 0.000000e+00 : f32
    %74 = vector.broadcast %cst_24 : f32 to vector<8x1xf32>
    %75 = arith.select %72, %73, %74 : vector<8x1xi1>, vector<8x1xf32>
    %76 = vector.shape_cast %75 : vector<8x1xf32> to vector<1x8x1xf32>
    %cst_25 = arith.constant dense<0.000000e+00> : vector<1xf32>
    %77 = vector.multi_reduction <add>, %76, %cst_25 [1, 2] : vector<1x8x1xf32> to vector<1xf32>
    %78 = vector.shape_cast %77 : vector<1xf32> to vector<1x1x1xf32>
    %79 = vector.extract %78[0, 0, 0] : f32 from vector<1x1x1xf32>
    %80 = vector.broadcast %79 : f32 to vector<1x1xf32>
    %81 = vector.shape_cast %80 : vector<1x1xf32> to vector<1x1x1xf32>
    %c0_26 = arith.constant 0 : index
    %c0_27 = arith.constant 0 : index
    %c0_28 = arith.constant 0 : index
    %82 = vector.load %arg5[%c0_26, %c0_27, %c0_28] : memref<1x1x1xf32, #tpu.memory_space<vmem>>, vector<1x1x1xf32>
    tpu.vector_store %arg5[%c0_26, %c0_27, %c0_28], %81 {strides = array<i32>} : memref<1x1x1xf32, #tpu.memory_space<vmem>>, vector<1x1x1xf32>,
    return
  }
  func.func @transform_0(%arg0: i32, %arg1: memref<16xi32, #tpu.memory_space<smem>>) -> (i32, i32) {
    %c0_i32 = arith.constant 0 : i32
    %c0_i32_0 = arith.constant 0 : i32
    return %arg0, %c0_i32 : i32, i32
  }
  func.func @transform_1(%arg0: i32, %arg1: memref<16xi32, #tpu.memory_space<smem>>) -> (i32, i32) {
    %c0_i32 = arith.constant 0 : i32
    %c0_i32_0 = arith.constant 0 : i32
    %c0_i32_1 = arith.constant 0 : i32
    return %c0_i32, %c0_i32_0 : i32, i32
  }
  func.func @transform_2(%arg0: i32, %arg1: memref<16xi32, #tpu.memory_space<smem>>) -> (i32, i32) {
    %c0_i32 = arith.constant 0 : i32
    %c0_i32_0 = arith.constant 0 : i32
    return %arg0, %c0_i32 : i32, i32
  }
  func.func @transform_3(%arg0: i32, %arg1: memref<16xi32, #tpu.memory_space<smem>>) -> (i32, i32, i32) {
    %c0_i32 = arith.constant 0 : i32
    %c0_i32_0 = arith.constant 0 : i32
    %c0_i32_1 = arith.constant 0 : i32
    return %arg0, %c0_i32, %c0_i32_0 : i32, i32, i32
  }
}

</mosaic_0001>

<llo_original>
// kernel: tpu_custom_call.1
$region0: #{tpu_custom_call.1}
  #allocation0 [shape = 'u32[]', space=smem, size = 0x4, offset = 0x4, fixed_abs, tag = 'smem constant byte address 0x4 - core index']
  #allocation1 [shape = 'u32[72,128]{1,0:T(1,128)}', space=vmem, size = 0x9000, scoped, tag = 'internal scratch']
  #allocation2 [shape = 's32[1]{0}', space=sflag, size = 0x4, scoped, tag = 'scoped memory for tpu_custom_call.1']
  #allocation3 [shape = 'u8[512]{0}', space=smem, size = 0x200, scoped, tag = 'prefetched SMEM operand 0']
  %s0 = inlined_call_operand.vmem [shape: s32[16], index: 0, kind: input, shape index: {}]
  %s1 = inlined_call_operand.vmem [shape: s32[16,1], index: 1, kind: input, shape index: {}]
  %s2 = inlined_call_operand.hbm [shape: f32[32,128], index: 2, kind: input, shape index: {}]
  %s3 = inlined_call_operand.hbm [shape: f32[16,128], index: 3, kind: output, shape index: {0}]
  %s4 = inlined_call_operand.vmem [shape: f32[2,1,1], index: 4, kind: output, shape index: {1}]
  %5 = xla_tuple %s3, %s4
  %s6 = sld [smem:[#allocation0]]
  $region53: #{tpu_custom_call.1} parent=0
    _
  %s8 = ssub.s32 1, %s6
  %s9 = scalar_select 0, %s8, %s6
  %s11 = sshll.u32 %s0, 4
  %s12 = int_to_ptr.vmem [resolvable:$true] %s11
  %14 = dma.vmem_to_smem %s12, 16, [#allocation3], [#allocation2]
  %16 = dma.done [#allocation2], 16
  %17 = sfence
  $region1: #{tpu_custom_call.1} parent=0
    #allocation4 [shape = 'u8[16384]{0}', space=vmem, size = 0x4000, scoped, tag = 'input window, operand 2, single buffered']
    #allocation5 [shape = 's32[2]{0}', space=sflag, size = 0x8, scoped, tag = 'scoped memory for tpu_custom_call.1']
    #allocation6 [shape = 's32[2]{0}', space=sflag, size = 0x8, scoped, tag = 'scoped memory for tpu_custom_call.1']
    #allocation7 [shape = 'u8[8192]{0}', space=vmem, size = 0x2000, scoped, tag = 'output window, operand 0']
    %18 = vsyncpa [#allocation5], 0
    %19 = vsyncpa [#allocation6], 0
    %s20 = scalar_lea.sflag [#allocation6], 1
    %21 = vsyncpa %s20, 0
    loop: start=0, step=1, limit=4
    $region2: #{tpu_custom_call.1} parent=1 // loop_pre_header
      _
    $region3: #{tpu_custom_call.1} parent=1 // loop_header
      %s23 = sphi 0, %s27
      %p24 = scmp.ge.s32.totalorder %s23, 4
      %s33 = sphi 0, %s35
      %s36 = sphi 0, %s33
      %s37 = sphi 0, %s36
      %s53 = sphi 0, %s37
      %s57 = sphi 0, %s57
      %s59 = sphi 0, %s57
      %s60 = sphi 0, %s59
      %s74 = sphi 0, %s60
      %s80 = sphi 0, %s82
      %s83 = sphi 0, %s80
      %s84 = sphi 0, %s83
      %s100 = sphi 0, %s84
      %s106 = sphi 0, %s108
      %s109 = sphi 0, %s106
      %s110 = sphi 0, %s109
      %s126 = sphi 0, %s110
    $region4: #{tpu_custom_call.1} parent=1 // loop_header_branch
      %26 = sbr.rel (%p24) target = $region8
    $region5: #{tpu_custom_call.1} parent=1 // loop_body
      %s28 = ssub.s32 %s23, 1
      %s29 = ssub.s32 %s23, 2
      %s30 = sadd.s32 %s23, 1
      %s31 = ssub.s32 %s23, %s30
      %p32 = scmp.eq.s32.totalorder %s31, 0
      %s34 = sadd.s32 %s33, 1
      %s35 = scalar_select %p32, %s33, %s34
      %p38 = pneg %p32
      %p39 = scmp.eq.s32.totalorder %s23, 1
      %p40 = por %p38, %p39
      %p41 = scmp.ne.s32.totalorder %s33, %s36
      %p42 = scmp.eq.s32.totalorder %s23, 0
      %p43 = por %p41, %p42
      %p44 = scmp.ne.s32.totalorder %s33, %s36
      %p45 = scmp.eq.s32.totalorder %s28, 1
      %p46 = por %p44, %p45
      %p47 = scmp.ne.s32.totalorder %s36, %s37
      %p48 = scmp.eq.s32.totalorder %s28, 0
      %p49 = por %p47, %p48
      %p50 = scmp.ne.s32.totalorder %s36, %s37
      %p51 = scmp.eq.s32.totalorder %s29, 1
      %p52 = por %p50, %p51
      %p54 = scmp.ne.s32.totalorder %s37, %s53
      %p55 = scmp.eq.s32.totalorder %s29, 0
      %p56 = por %p54, %p55
      %s58 = sadd.s32 %s57, 1
      %p61 = scmp.eq.s32.totalorder %s23, 1
      %p62 = scmp.ne.s32.totalorder %s57, %s59
      %p63 = scmp.eq.s32.totalorder %s23, 0
      %p64 = por %p62, %p63
      %p65 = scmp.ne.s32.totalorder %s57, %s59
      %p66 = scmp.eq.s32.totalorder %s28, 1
      %p67 = por %p65, %p66
      %p68 = scmp.ne.s32.totalorder %s59, %s60
      %p69 = scmp.eq.s32.totalorder %s28, 0
      %p70 = por %p68, %p69
      %p71 = scmp.ne.s32.totalorder %s59, %s60
      %p72 = scmp.eq.s32.totalorder %s29, 1
      %p73 = por %p71, %p72
      %p75 = scmp.ne.s32.totalorder %s60, %s74
      %p76 = scmp.eq.s32.totalorder %s29, 0
      %p77 = por %p75, %p76
      %s78 = ssub.s32 %s23, %s30
      %p79 = scmp.eq.s32.totalorder %s78, 0
      %s81 = sadd.s32 %s80, 1
      %s82 = scalar_select %p79, %s80, %s81
      %p85 = pneg %p79
      %p86 = scmp.eq.s32.totalorder %s23, 1
      %p87 = por %p85, %p86
      %p88 = scmp.ne.s32.totalorder %s80, %s83
      %p89 = scmp.eq.s32.totalorder %s23, 0
      %p90 = por %p88, %p89
      %p91 = scmp.ne.s32.totalorder %s80, %s83
      %p92 = scmp.eq.s32.totalorder %s28, 1
      %p93 = por %p91, %p92
      %p94 = scmp.ne.s32.totalorder %s83, %s84
      %p95 = scmp.eq.s32.totalorder %s28, 0
      %p96 = por %p94, %p95
      %p97 = scmp.ne.s32.totalorder %s83, %s84
      %p98 = scmp.eq.s32.totalorder %s29, 1
      %p99 = por %p97, %p98
      %p101 = scmp.ne.s32.totalorder %s84, %s100
      %p102 = scmp.eq.s32.totalorder %s29, 0
      %p103 = por %p101, %p102
      %s104 = ssub.s32 %s23, %s30
      %p105 = scmp.eq.s32.totalorder %s104, 0
      %s107 = sadd.s32 %s106, 1
      %s108 = scalar_select %p105, %s106, %s107
      %p111 = pneg %p105
      %p112 = scmp.eq.s32.totalorder %s23, 1
      %p113 = por %p111, %p112
      %p114 = scmp.ne.s32.totalorder %s106, %s109
      %p115 = scmp.eq.s32.totalorder %s23, 0
      %p116 = por %p114, %p115
      %p117 = scmp.ne.s32.totalorder %s106, %s109
      %p118 = scmp.eq.s32.totalorder %s28, 1
      %p119 = por %p117, %p118
      %p120 = scmp.ne.s32.totalorder %s109, %s110
      %p121 = scmp.eq.s32.totalorder %s28, 0
      %p122 = por %p120, %p121
      %p123 = scmp.ne.s32.totalorder %s109, %s110
      %p124 = scmp.eq.s32.totalorder %s29, 1
      %p125 = por %p123, %p124
      %p127 = scmp.ne.s32.totalorder %s110, %s126
      %p128 = scmp.eq.s32.totalorder %s29, 0
      %p129 = por %p127, %p128
      %p130 = scmp.le.s32.totalorder 1, %s23
      %p131 = scmp.lt.s32.totalorder %s23, 3
      %p132 = pnand %p130, %p131
      %p133 = pneg %p132
      // Predicated region
      $region9: #{tpu_custom_call.1} parent=5 // pred_check
        _
      $region10: #{tpu_custom_call.1} parent=5 // pred_check_branch
        %135 = sbr.rel (%p132) target = $region12
      $region11: #{tpu_custom_call.1} parent=5 // pred_region
        %s136 = ssub.s32 %s23, 1
        // Predicated region
        $region13: #{tpu_custom_call.1} parent=11 // pred_check
          %p137 = pneg %p70
        $region14: #{tpu_custom_call.1} parent=11 // pred_check_branch
          %139 = sbr.rel (%p137) target = $region16
        $region15: #{tpu_custom_call.1} parent=11 // pred_region
          %141 = vsyncadd [#allocation5], 0
          %s142 = sshll.u32 %s2, 4
          %s143 = int_to_ptr.hbm [resolvable:$true] %s142
          %s144 = sshll.u32 [#allocation4], 4
          %s145 = int_to_ptr.vmem [resolvable:$true] %s144
          %150 = dma.hbm_to_vmem [thread:$0]  %s143, 512, %s145, [#allocation5], 128, 128, 8
        $region16: #{tpu_custom_call.1} parent=11 // pred_fallthru
          _
      $region12: #{tpu_custom_call.1} parent=5 // pred_fallthru
        _
      %p151 = scmp.lt.s32.totalorder %s23, 2
      // Predicated region
      $region17: #{tpu_custom_call.1} parent=5 // pred_check
        %p152 = pneg %p151
      $region18: #{tpu_custom_call.1} parent=5 // pred_check_branch
        %154 = sbr.rel (%p152) target = $region20
      $region19: #{tpu_custom_call.1} parent=5 // pred_region
        // Predicated region
        $region21: #{tpu_custom_call.1} parent=19 // pred_check
          %p155 = pneg %p43
        $region22: #{tpu_custom_call.1} parent=19 // pred_check_branch
          %157 = sbr.rel (%p155) target = $region24
        $region23: #{tpu_custom_call.1} parent=19 // pred_region
          %p158 = scmp.lt.s32.totalorder %s23, 1
          %s159 = scalar_select %p158, %s23, 1
          %s160 = smul.addr %s159, 8
          %s161 = scalar_lea.vmem %s1, %s160
        $region24: #{tpu_custom_call.1} parent=19 // pred_fallthru
          _
      $region20: #{tpu_custom_call.1} parent=5 // pred_fallthru
        _
      %p162 = scmp.le.s32.totalorder 1, %s23
      %p163 = scmp.lt.s32.totalorder %s23, 3
      %p164 = pnand %p162, %p163
      %p165 = pneg %p164
      // Predicated region
      $region25: #{tpu_custom_call.1} parent=5 // pred_check
        _
      $region26: #{tpu_custom_call.1} parent=5 // pred_check_branch
        %167 = sbr.rel (%p164) target = $region28
      $region27: #{tpu_custom_call.1} parent=5 // pred_region
        %s168 = ssub.s32 %s23, 1
        // Predicated region
        $region29: #{tpu_custom_call.1} parent=27 // pred_check
          %p169 = pneg %p70
        $region30: #{tpu_custom_call.1} parent=27 // pred_check_branch
          %171 = sbr.rel (%p169) target = $region32
        $region31: #{tpu_custom_call.1} parent=27 // pred_region
          %173 = dma.done [#allocation5], 512
        $region32: #{tpu_custom_call.1} parent=27 // pred_fallthru
          _
        %p174 = scmp.lt.s32.totalorder %s28, 1
        %s175 = scalar_select %p174, %s28, 1
        %s176 = smul.addr %s175, 8
        %s177 = scalar_lea.vmem %s1, %s176
        %p178 = pneg %p49
        %p179 = pneg %p46
        %p180 = pneg %p70
        %p181 = pneg %p67
        %p182 = pneg %p96
        %p183 = pneg %p93
        %s184 = sand.u32 %s83, 1
        %s185 = scalar_lea.sflag [#allocation6], %s184
        %s186 = sand.u32 %s83, 1
        %s187 = smul.addr %s186, 8
        %s188 = scalar_lea.vmem [#allocation7], %s187
        %p189 = pneg %p122
        %p190 = pneg %p119
        %p191 = scmp.lt.s32.totalorder %s28, 1
        %s192 = scalar_select %p191, %s28, 1
        %s193 = scalar_lea.vmem %s4, %s192
        %p194 = scmp.lt.s32.totalorder %s28, 1
        %s195 = scalar_select %p194, %s28, 1
        %s196 = smul.addr %s195, 8
        %s197 = scalar_lea.vmem %s1, %s196
        %p198 = scmp.lt.s32.totalorder %s28, 1
        %s199 = scalar_select %p198, %s28, 1
        %s200 = scalar_lea.vmem %s4, %s199
        %s201 = smul.u32 %s28, 8
        %s202 = sld [smem:[#allocation3 + %s201]]
        %s203 = scalar_lea.vmem [#allocation4], %s202
        %v204 = vld [vmem:[%s203] sm:$0x1]
        %205 = vst [vmem:[%s188] sm:$0x1] %v204
        %s206 = sadd.s32 %s201, 1
        %s207 = sld [smem:[#allocation3 + %s206]]
        %s208 = scalar_lea.vmem [#allocation4], %s207
        %v209 = vld [vmem:[%s208] sm:$0x1]
        %210 = vst [vmem:[%s188 + $0x1] sm:$0x1] %v209
        %s211 = sadd.s32 %s201, 2
        %s212 = sld [smem:[#allocation3 + %s211]]
        %s213 = scalar_lea.vmem [#allocation4], %s212
        %v214 = vld [vmem:[%s213] sm:$0x1]
        %215 = vst [vmem:[%s188 + $0x2] sm:$0x1] %v214
        %s216 = sadd.s32 %s201, 3
        %s217 = sld [smem:[#allocation3 + %s216]]
        %s218 = scalar_lea.vmem [#allocation4], %s217
        %v219 = vld [vmem:[%s218] sm:$0x1]
        %220 = vst [vmem:[%s188 + $0x3] sm:$0x1] %v219
        %s221 = sadd.s32 %s201, 4
        %s222 = sld [smem:[#allocation3 + %s221]]
        %s223 = scalar_lea.vmem [#allocation4], %s222
        %v224 = vld [vmem:[%s223] sm:$0x1]
        %225 = vst [vmem:[%s188 + $0x4] sm:$0x1] %v224
        %s226 = sadd.s32 %s201, 5
        %s227 = sld [smem:[#allocation3 + %s226]]
        %s228 = scalar_lea.vmem [#allocation4], %s227
        %v229 = vld [vmem:[%s228] sm:$0x1]
        %230 = vst [vmem:[%s188 + $0x5] sm:$0x1] %v229
        %s231 = sadd.s32 %s201, 6
        %s232 = sld [smem:[#allocation3 + %s231]]
        %s233 = scalar_lea.vmem [#allocation4], %s232
        %v234 = vld [vmem:[%s233] sm:$0x1]
        %235 = vst [vmem:[%s188 + $0x6] sm:$0x1] %v234
        %s236 = sadd.s32 %s201, 7
        %s237 = sld [smem:[#allocation3 + %s236]]
        %s238 = scalar_lea.vmem [#allocation4], %s237
        %v239 = vld [vmem:[%s238] sm:$0x1]
        %240 = vst [vmem:[%s188 + $0x7] sm:$0x1] %v239
        %v241 = vld [vmem:[%s188] sm:$0xff]
        %242 = vmax.xlane.f32.xlu0 %v241
        %v243 = vpop.xlane.xlu0 %242
        %v244 = vsub.f32 %v241, %v243
        %v245 = vmul.f32 %v244, 1.442695
        %v246 = vpow.pop %v245
        %247 = vadd.xlane.f32.xlu0 %v246
        %v248 = vpop.xlane.xlu0 %247
        %v249 = vlog2.pop %v248
        %v250 = vmul.f32 %v249, 0.6931472
        %v251 = vadd.f32 %v243, %v250
        %v252 = vlaneseq
        %v253 = vand.u32 %v252, 127
        %v254 = vld [vmem:[%s197] sm:$0xff]
        %255 = vset.pattern.permute.xlu0 0
        %256 = vperm.xlu0 %255, %v254
        %v257 = vpop.permute.xlu0 %256
        %vm258 = vcmp.eq.s32.totalorder %v253, %v257
        %v259 = vsel %vm258, %v241, 0.0
        %260 = vadd.xlane.f32.xlu0 %v259
        %v261 = vpop.xlane.xlu0 %260
        %v262 = vlaneseq
        %v263 = vshrl.u32 %v262, 7
        %v264 = vstv %s201
        %v265 = vadd.s32 %v264, %v263
        %vm266 = vcmp.lt.s32.totalorder %v265, 16
        %v267 = vsub.f32 %v251, %v261
        %v268 = vsel %vm266, %v267, 0.0
        %vm269 = vcmask 7168
        %v270 = vsel %vm269, %v268, 0.0
        %271 = vadd.xlane.f32.xlu0 %v270
        %v272 = vpop.xlane.xlu0 %271
        %v273 = vrot.slane %v272, 4
        %v274 = vadd.f32 %v272, %v273
        %v275 = vrot.slane %v274, 2
        %v276 = vadd.f32 %v274, %v275
        %v277 = vrot.slane %v276, 1
        %v278 = vadd.f32 %v276, %v277
        %s279 = vtos %v278
        %v280 = vstv %s279
        %vm281 = vcmask 0
        %282 = vst.msk [vmem:[%s200] sm:$0x1] %vm281, %v280
        %s283 = sand.u32 %s83, 1
        %s284 = scalar_lea.sflag [#allocation6], %s283
        %s285 = sand.u32 %s83, 1
        %s286 = smul.addr %s285, 8
        %s287 = scalar_lea.vmem [#allocation7], %s286
        %p288 = scmp.lt.s32.totalorder %s28, 1
        %s289 = scalar_select %p288, %s28, 1
        %s290 = scalar_lea.vmem %s4, %s289
        // Predicated region
        $region33: #{tpu_custom_call.1} parent=27 // pred_check
          %p291 = pneg %p93
        $region34: #{tpu_custom_call.1} parent=27 // pred_check_branch
          %293 = sbr.rel (%p291) target = $region36
        $region35: #{tpu_custom_call.1} parent=27 // pred_region
          %295 = vsyncadd %s284, 0
          %s296 = smul.addr %s28, 8
          %s297 = scalar_lea.hbm %s3, %s296
          %s299 = sshll.u32 %s287, 4
          %s300 = int_to_ptr.vmem [resolvable:$true] %s299
          %s301 = sshll.u32 %s297, 4
          %s302 = int_to_ptr.hbm [resolvable:$true] %s301
          %304 = dma.vmem_to_hbm [thread:$0]  %s300, 128, %s302, %s284
        $region36: #{tpu_custom_call.1} parent=27 // pred_fallthru
          _
        // Predicated region
        $region37: #{tpu_custom_call.1} parent=27 // pred_check
          %p305 = pneg %p119
        $region38: #{tpu_custom_call.1} parent=27 // pred_check_branch
          %307 = sbr.rel (%p305) target = $region40
        $region39: #{tpu_custom_call.1} parent=27 // pred_region
          _
        $region40: #{tpu_custom_call.1} parent=27 // pred_fallthru
          _
      $region28: #{tpu_custom_call.1} parent=5 // pred_fallthru
        _
      %p308 = scmp.le.s32.totalorder 2, %s23
      // Predicated region
      $region41: #{tpu_custom_call.1} parent=5 // pred_check
        %p309 = pneg %p308
      $region42: #{tpu_custom_call.1} parent=5 // pred_check_branch
        %311 = sbr.rel (%p309) target = $region44
      $region43: #{tpu_custom_call.1} parent=5 // pred_region
        %s312 = ssub.s32 %s23, 2
        // Predicated region
        $region45: #{tpu_custom_call.1} parent=43 // pred_check
          %p313 = pneg %p99
        $region46: #{tpu_custom_call.1} parent=43 // pred_check_branch
          %315 = sbr.rel (%p313) target = $region48
        $region47: #{tpu_custom_call.1} parent=43 // pred_region
          %s316 = sand.u32 %s84, 1
          %s317 = scalar_lea.sflag [#allocation6], %s316
          %s318 = sand.u32 %s84, 1
          %s319 = smul.addr %s318, 8
          %s320 = scalar_lea.vmem [#allocation7], %s319
          %322 = dma.done %s317, 128
        $region48: #{tpu_custom_call.1} parent=43 // pred_fallthru
          _
        // Predicated region
        $region49: #{tpu_custom_call.1} parent=43 // pred_check
          %p323 = pneg %p125
        $region50: #{tpu_custom_call.1} parent=43 // pred_check_branch
          %325 = sbr.rel (%p323) target = $region52
        $region51: #{tpu_custom_call.1} parent=43 // pred_region
          %p326 = scmp.lt.s32.totalorder %s29, 1
          %s327 = scalar_select %p326, %s29, 1
          %s328 = scalar_lea.vmem %s4, %s327
        $region52: #{tpu_custom_call.1} parent=43 // pred_fallthru
          _
      $region44: #{tpu_custom_call.1} parent=5 // pred_fallthru
        _
    $region6: #{tpu_custom_call.1} parent=1 // loop_footer
      %s27 = sadd.s32 1, %s23
    $region7: #{tpu_custom_call.1} parent=1 // loop_footer_branch
      %22 = sbr.rel target = $region3
    $region8: #{tpu_custom_call.1} parent=1 // loop_exit
      _
    %329 = vsyncpa [#allocation5], 1
    %s330 = scalar_lea.sflag [#allocation5], 1
    %331 = vsyncpa %s330, 1
    %332 = vsyncpa [#allocation6], 1
    %s333 = scalar_lea.sflag [#allocation6], 1
    %334 = vsyncpa %s333, 1

</llo_original>
